<compile_context>
chip_gen: v7x
topology: tpu7x:2x2x1
jax: 0.10.0
libtpu: 0.0.40
codegen_flags: <defaults>
</compile_context>

<pallas_src>
import jax
import jax.numpy as jnp
from jax.experimental import pallas as pl
from jax.experimental.pallas import tpu as pltpu


def _ef_decay_kernel(ea_ref, ef_ref, out_ref):
    # ea_ref: (tile_n, 1), ef_ref / out_ref: (tile_n, D)
    out_ref[...] = ea_ref[...] * ef_ref[...]


def _round_up(x, m):
    return ((x + m - 1) // m) * m


def _vmem_limit_bytes():
    """Per-generation scoped-VMEM limit: physical/2, conservative fallback 32 MiB."""
    try:
        physical = int(pltpu.get_tpu_info().vmem_capacity_bytes)
    except Exception:  # query unavailable (e.g. off-device tracing) -> assume v7x-sized VMEM
        physical = 64 << 20
    return max(16 << 20, min(physical // 2, 64 << 20))


def _pick_tile_n(n, d, itemsize, *, max_tile_n, vmem_buffer_budget):
    """Largest row tile whose live pipeline buffers fit the VMEM budget.

    Live buffers per row (double-buffered pipeline):
      ef input : 2 * d * itemsize
      out      : 2 * d * itemsize
      ea col   : 2 * 128 * itemsize   (lane-padded (tile_n, 1) block)
    """
    per_row = (4 * d + 2 * 128) * itemsize
    rows = vmem_buffer_budget // per_row
    rows = min(rows, max_tile_n)
    if n > 8:
        # Force >= 2 row blocks so the "parallel" axis can shard across v7x's
        # two TensorCores; one extra grid step is negligible on 1-TC chips.
        rows = min(rows, _round_up(pl.cdiv(n, 2), 8))
    rows = max(8, (rows // 8) * 8)  # sublane dim must stay a multiple of 8
    if rows >= n:
        return n  # single full-extent block (legal for any n)
    return rows


def ef_decay(ea, ef, *, max_tile_n=16384):
    """Returns (ea, ea[..., None] * ef) with the multiply done in Pallas."""
    n, d = ef.shape
    assert ea.shape == (n,)

    itemsize = jnp.dtype(ef.dtype).itemsize
    vmem_limit = _vmem_limit_bytes()
    buffer_budget = (3 * vmem_limit) // 4  # leave headroom under the scoped limit
    tile_n = _pick_tile_n(
        n, d, itemsize, max_tile_n=max_tile_n, vmem_buffer_budget=buffer_budget
    )
    grid_n = pl.cdiv(n, tile_n)

    # Lane-broadcastable column vector; negligible extra HBM traffic.
    ea_col = ea.reshape(n, 1)

    out = pl.pallas_call(
        _ef_decay_kernel,
        out_shape=jax.ShapeDtypeStruct((n, d), ef.dtype),
        grid_spec=pltpu.PrefetchScalarGridSpec(
            num_scalar_prefetch=0,
            grid=(grid_n,),
            in_specs=[
                pl.BlockSpec((tile_n, 1), lambda i: (i, 0)),
                pl.BlockSpec((tile_n, d), lambda i: (i, 0)),
            ],
            out_specs=pl.BlockSpec((tile_n, d), lambda i: (i, 0)),
        ),
        compiler_params=pltpu.CompilerParams(
            dimension_semantics=("parallel",),
            vmem_limit_bytes=vmem_limit,
        ),
    )(ea_col, ef)

    return ea, out


if __name__ == "__main__":
    key = jax.random.PRNGKey(0)
    k_ea, k_ef = jax.random.split(key)

    n_edges, feat_dim = 200, 96  # small, non-tile-aligned on purpose
    ea = jax.random.normal(k_ea, (n_edges,), dtype=jnp.float32)
    ef = jax.random.normal(k_ef, (n_edges, feat_dim), dtype=jnp.float32)

    ref = ea[:, None] * ef  # plain-JAX reference (PyTorch broadcast semantics)

    # 1) Default path: two row blocks (>=2 enforced for v7x TC sharding) with a
    #    ragged, masked last block.
    ea_out, decayed = ef_decay(ea, ef)
    jax.block_until_ready((ea_out, decayed))
    assert ea_out.shape == ea.shape and decayed.shape == ef.shape
    assert jnp.allclose(decayed, ref, atol=1e-6, rtol=1e-6)
    assert jnp.array_equal(ea_out, ea)

    # 2) Forced small tile to exercise a longer multi-block grid.
    ea_out2, decayed2 = ef_decay(ea, ef, max_tile_n=64)
    jax.block_until_ready((ea_out2, decayed2))
    assert jnp.allclose(decayed2, ref, atol=1e-6, rtol=1e-6)
    assert jnp.array_equal(ea_out2, ea)

    print("KERNEL_OK")
</pallas_src>

<mosaic_0001>
module attributes {stable_mosaic.version = 11 : i64} {
  func.func @_ef_decay_kernel(%arg0: i32, %arg1: memref<104x1xf32, #tpu.memory_space<vmem>>, %arg2: memref<104x96xf32, #tpu.memory_space<vmem>>, %arg3: memref<104x96xf32, #tpu.memory_space<vmem>>) attributes {dimension_semantics = [#tpu.dimension_semantics<parallel>], iteration_bounds = array<i64: 2>, scalar_prefetch = 0 : i64, scratch_operands = 0 : i64, tpu.core_type = #tpu.core_type<tc>, window_params = [{transform_indices = @transform_0, window_bounds = array<i64: 104, 1>}, {transform_indices = @transform_1, window_bounds = array<i64: 104, 96>}, {transform_indices = @transform_2, window_bounds = array<i64: 104, 96>}]} {
    %c0 = arith.constant 0 : index
    %c0_0 = arith.constant 0 : index
    %0 = vector.load %arg1[%c0, %c0_0] : memref<104x1xf32, #tpu.memory_space<vmem>>, vector<104x1xf32>
    %c0_1 = arith.constant 0 : index
    %c0_2 = arith.constant 0 : index
    %1 = vector.load %arg2[%c0_1, %c0_2] : memref<104x96xf32, #tpu.memory_space<vmem>>, vector<104x96xf32>
    %2 = vector.broadcast %0 : vector<104x1xf32> to vector<104x96xf32>
    %3 = arith.mulf %2, %1 : vector<104x96xf32>
    %c0_3 = arith.constant 0 : index
    %c0_4 = arith.constant 0 : index
    %4 = vector.load %arg3[%c0_3, %c0_4] : memref<104x96xf32, #tpu.memory_space<vmem>>, vector<104x96xf32>
    tpu.vector_store %arg3[%c0_3, %c0_4], %3 {strides = array<i32>} : memref<104x96xf32, #tpu.memory_space<vmem>>, vector<104x96xf32>,
    return
  }
  func.func @transform_0(%arg0: i32) -> (i32, i32) {
    %c0_i32 = arith.constant 0 : i32
    %c0_i32_0 = arith.constant 0 : i32
    return %arg0, %c0_i32 : i32, i32
  }
  func.func @transform_1(%arg0: i32) -> (i32, i32) {
    %c0_i32 = arith.constant 0 : i32
    %c0_i32_0 = arith.constant 0 : i32
    return %arg0, %c0_i32 : i32, i32
  }
  func.func @transform_2(%arg0: i32) -> (i32, i32) {
    %c0_i32 = arith.constant 0 : i32
    %c0_i32_0 = arith.constant 0 : i32
    return %arg0, %c0_i32 : i32, i32
  }
}

</mosaic_0001>

<llo_original>
// kernel: tpu_custom_call.1
$region0: #{tpu_custom_call.1}
  #allocation0 [shape = 'u32[]', space=smem, size = 0x4, offset = 0x4, fixed_abs, tag = 'smem constant byte address 0x4 - core index']
  #allocation1 [shape = 'u32[144,128]{1,0:T(1,128)}', space=vmem, size = 0x12000, scoped, tag = 'internal scratch']
  %s0 = inlined_call_operand.vmem [shape: f32[200,1], index: 0, kind: input, shape index: {}]
  %s1 = inlined_call_operand.vmem [shape: f32[200,96], index: 1, kind: input, shape index: {}]
  %s2 = inlined_call_operand.vmem [shape: f32[200,96], index: 2, kind: output, shape index: {}]
  %s3 = sld [smem:[#allocation0]]
  $region89: #{tpu_custom_call.1} parent=0
    _
  %s5 = ssub.s32 1, %s3
  %s6 = scalar_select 0, %s5, %s3
  $region1: #{tpu_custom_call.1} parent=0
    #allocation2 [shape = 'u8[106496]{0}', space=vmem, size = 0x1a000, scoped, tag = 'output window, operand 0']
    loop: start=0, step=1, limit=4
    $region2: #{tpu_custom_call.1} parent=1 // loop_pre_header
      _
    $region3: #{tpu_custom_call.1} parent=1 // loop_header
      %s8 = sphi 0, %s12
      %p9 = scmp.ge.s32.totalorder %s8, 4
      %s18 = sphi 0, %s20
      %s21 = sphi 0, %s18
      %s22 = sphi 0, %s21
      %s38 = sphi 0, %s22
      %s44 = sphi 0, %s46
      %s47 = sphi 0, %s44
      %s48 = sphi 0, %s47
      %s64 = sphi 0, %s48
      %s70 = sphi 0, %s72
      %s73 = sphi 0, %s70
      %s74 = sphi 0, %s73
      %s90 = sphi 0, %s74
    $region4: #{tpu_custom_call.1} parent=1 // loop_header_branch
      %11 = sbr.rel (%p9) target = $region8
    $region5: #{tpu_custom_call.1} parent=1 // loop_body
      %s13 = ssub.s32 %s8, 1
      %s14 = ssub.s32 %s8, 2
      %s15 = sadd.s32 %s8, 1
      %s16 = ssub.s32 %s8, %s15
      %p17 = scmp.eq.s32.totalorder %s16, 0
      %s19 = sadd.s32 %s18, 1
      %s20 = scalar_select %p17, %s18, %s19
      %p23 = pneg %p17
      %p24 = scmp.eq.s32.totalorder %s8, 1
      %p25 = por %p23, %p24
      %p26 = scmp.ne.s32.totalorder %s18, %s21
      %p27 = scmp.eq.s32.totalorder %s8, 0
      %p28 = por %p26, %p27
      %p29 = scmp.ne.s32.totalorder %s18, %s21
      %p30 = scmp.eq.s32.totalorder %s13, 1
      %p31 = por %p29, %p30
      %p32 = scmp.ne.s32.totalorder %s21, %s22
      %p33 = scmp.eq.s32.totalorder %s13, 0
      %p34 = por %p32, %p33
      %p35 = scmp.ne.s32.totalorder %s21, %s22
      %p36 = scmp.eq.s32.totalorder %s14, 1
      %p37 = por %p35, %p36
      %p39 = scmp.ne.s32.totalorder %s22, %s38
      %p40 = scmp.eq.s32.totalorder %s14, 0
      %p41 = por %p39, %p40
      %s42 = ssub.s32 %s8, %s15
      %p43 = scmp.eq.s32.totalorder %s42, 0
      %s45 = sadd.s32 %s44, 1
      %s46 = scalar_select %p43, %s44, %s45
      %p49 = pneg %p43
      %p50 = scmp.eq.s32.totalorder %s8, 1
      %p51 = por %p49, %p50
      %p52 = scmp.ne.s32.totalorder %s44, %s47
      %p53 = scmp.eq.s32.totalorder %s8, 0
      %p54 = por %p52, %p53
      %p55 = scmp.ne.s32.totalorder %s44, %s47
      %p56 = scmp.eq.s32.totalorder %s13, 1
      %p57 = por %p55, %p56
      %p58 = scmp.ne.s32.totalorder %s47, %s48
      %p59 = scmp.eq.s32.totalorder %s13, 0
      %p60 = por %p58, %p59
      %p61 = scmp.ne.s32.totalorder %s47, %s48
      %p62 = scmp.eq.s32.totalorder %s14, 1
      %p63 = por %p61, %p62
      %p65 = scmp.ne.s32.totalorder %s48, %s64
      %p66 = scmp.eq.s32.totalorder %s14, 0
      %p67 = por %p65, %p66
      %s68 = ssub.s32 %s8, %s15
      %p69 = scmp.eq.s32.totalorder %s68, 0
      %s71 = sadd.s32 %s70, 1
      %s72 = scalar_select %p69, %s70, %s71
      %p75 = pneg %p69
      %p76 = scmp.eq.s32.totalorder %s8, 1
      %p77 = por %p75, %p76
      %p78 = scmp.ne.s32.totalorder %s70, %s73
      %p79 = scmp.eq.s32.totalorder %s8, 0
      %p80 = por %p78, %p79
      %p81 = scmp.ne.s32.totalorder %s70, %s73
      %p82 = scmp.eq.s32.totalorder %s13, 1
      %p83 = por %p81, %p82
      %p84 = scmp.ne.s32.totalorder %s73, %s74
      %p85 = scmp.eq.s32.totalorder %s13, 0
      %p86 = por %p84, %p85
      %p87 = scmp.ne.s32.totalorder %s73, %s74
      %p88 = scmp.eq.s32.totalorder %s14, 1
      %p89 = por %p87, %p88
      %p91 = scmp.ne.s32.totalorder %s74, %s90
      %p92 = scmp.eq.s32.totalorder %s14, 0
      %p93 = por %p91, %p92
      %p94 = scmp.le.s32.totalorder 1, %s8
      %p95 = scmp.lt.s32.totalorder %s8, 3
      %p96 = pnand %p94, %p95
      %p97 = pneg %p96
      // Predicated region
      $region9: #{tpu_custom_call.1} parent=5 // pred_check
        _
      $region10: #{tpu_custom_call.1} parent=5 // pred_check_branch
        %99 = sbr.rel (%p96) target = $region12
      $region11: #{tpu_custom_call.1} parent=5 // pred_region
        %s100 = ssub.s32 %s8, 1
      $region12: #{tpu_custom_call.1} parent=5 // pred_fallthru
        _
      %p101 = scmp.lt.s32.totalorder %s8, 2
      // Predicated region
      $region13: #{tpu_custom_call.1} parent=5 // pred_check
        %p102 = pneg %p101
      $region14: #{tpu_custom_call.1} parent=5 // pred_check_branch
        %104 = sbr.rel (%p102) target = $region16
      $region15: #{tpu_custom_call.1} parent=5 // pred_region
        // Predicated region
        $region17: #{tpu_custom_call.1} parent=15 // pred_check
          %p105 = pneg %p28
        $region18: #{tpu_custom_call.1} parent=15 // pred_check_branch
          %107 = sbr.rel (%p105) target = $region20
        $region19: #{tpu_custom_call.1} parent=15 // pred_region
          %s108 = smul.u32 13, %s8
          %s109 = ssub.s32 25, %s108
          %p110 = scmp.lt.s32.totalorder %s109, 13
          %s111 = scalar_select %p110, %s109, 13
          %s112 = smul.u32 128, %s111
          %p113 = scmp.lt.s32.totalorder %s108, 24
          %s114 = scalar_select %p113, %s108, 24
          %s115 = smul.addr %s114, 8
          %s116 = scalar_lea.vmem %s0, %s115
          %s117 = smul.u32 13, %s8
          %s118 = ssub.s32 25, %s117
          %p119 = scmp.lt.s32.totalorder %s118, 13
          %s120 = scalar_select %p119, %s118, 13
          %s121 = smul.u32 128, %s120
        $region20: #{tpu_custom_call.1} parent=15 // pred_fallthru
          _
        // Predicated region
        $region21: #{tpu_custom_call.1} parent=15 // pred_check
          %p122 = pneg %p54
        $region22: #{tpu_custom_call.1} parent=15 // pred_check_branch
          %124 = sbr.rel (%p122) target = $region24
        $region23: #{tpu_custom_call.1} parent=15 // pred_region
          %s125 = smul.u32 13, %s8
          %s126 = ssub.s32 25, %s125
          %p127 = scmp.lt.s32.totalorder %s126, 13
          %s128 = scalar_select %p127, %s126, 13
          %s129 = smul.u32 128, %s128
          %p130 = scmp.lt.s32.totalorder %s125, 24
          %s131 = scalar_select %p130, %s125, 24
          %s132 = smul.addr %s131, 8
          %s133 = scalar_lea.vmem %s1, %s132
          %s134 = smul.u32 13, %s8
          %s135 = ssub.s32 25, %s134
          %p136 = scmp.lt.s32.totalorder %s135, 13
          %s137 = scalar_select %p136, %s135, 13
          %s138 = smul.u32 128, %s137
        $region24: #{tpu_custom_call.1} parent=15 // pred_fallthru
          _
      $region16: #{tpu_custom_call.1} parent=5 // pred_fallthru
        _
      %p139 = scmp.le.s32.totalorder 1, %s8
      %p140 = scmp.lt.s32.totalorder %s8, 3
      %p141 = pnand %p139, %p140
      %p142 = pneg %p141
      // Predicated region
      $region25: #{tpu_custom_call.1} parent=5 // pred_check
        _
      $region26: #{tpu_custom_call.1} parent=5 // pred_check_branch
        %144 = sbr.rel (%p141) target = $region28
      $region27: #{tpu_custom_call.1} parent=5 // pred_region
        %s145 = ssub.s32 %s8, 1
        %s146 = smul.u32 13, %s13
        %s147 = ssub.s32 25, %s146
        %p148 = scmp.lt.s32.totalorder %s147, 13
        %s149 = scalar_select %p148, %s147, 13
        %s150 = smul.u32 128, %s149
        %p151 = scmp.lt.s32.totalorder %s146, 24
        %s152 = scalar_select %p151, %s146, 24
        %s153 = smul.addr %s152, 8
        %s154 = scalar_lea.vmem %s0, %s153
        %p155 = pneg %p34
        %p156 = pneg %p31
        %s157 = smul.u32 13, %s13
        %s158 = ssub.s32 25, %s157
        %p159 = scmp.lt.s32.totalorder %s158, 13
        %s160 = scalar_select %p159, %s158, 13
        %s161 = smul.u32 128, %s160
        %p162 = scmp.lt.s32.totalorder %s157, 24
        %s163 = scalar_select %p162, %s157, 24
        %s164 = smul.addr %s163, 8
        %s165 = scalar_lea.vmem %s1, %s164
        %p166 = pneg %p60
        %p167 = pneg %p57
        %p168 = pneg %p86
        %p169 = pneg %p83
        %s170 = sand.u32 %s73, 1
        %s171 = sand.u32 %s73, 1
        %s172 = smul.addr %s171, 104
        %s173 = scalar_lea.vmem [#allocation2], %s172
        %s174 = smul.u32 13, %s13
        %s175 = ssub.s32 25, %s174
        %p176 = scmp.lt.s32.totalorder %s175, 13
        %s177 = scalar_select %p176, %s175, 13
        %s178 = smul.u32 128, %s177
        %p179 = scmp.lt.s32.totalorder %s174, 24
        %s180 = scalar_select %p179, %s174, 24
        %s181 = smul.addr %s180, 8
        %s182 = scalar_lea.vmem %s0, %s181
        %s183 = smul.u32 13, %s13
        %s184 = ssub.s32 25, %s183
        %p185 = scmp.lt.s32.totalorder %s184, 13
        %s186 = scalar_select %p185, %s184, 13
        %s187 = smul.u32 128, %s186
        %s188 = smul.u32 13, %s13
        %s189 = ssub.s32 25, %s188
        %p190 = scmp.lt.s32.totalorder %s189, 13
        %s191 = scalar_select %p190, %s189, 13
        %s192 = smul.u32 128, %s191
        %p193 = scmp.lt.s32.totalorder %s188, 24
        %s194 = scalar_select %p193, %s188, 24
        %s195 = smul.addr %s194, 8
        %s196 = scalar_lea.vmem %s1, %s195
        %s197 = smul.u32 13, %s13
        %s198 = ssub.s32 25, %s197
        %p199 = scmp.lt.s32.totalorder %s198, 13
        %s200 = scalar_select %p199, %s198, 13
        %s201 = smul.u32 128, %s200
        %s202 = smul.u32 13, %s13
        %s203 = ssub.s32 25, %s202
        %p204 = scmp.lt.s32.totalorder %s203, 13
        %s205 = scalar_select %p204, %s203, 13
        %s206 = smul.u32 128, %s205
        %v207 = vld [vmem:[%s182] sm:$0xff]
        %v208 = vld [vmem:[%s182 + $0x8] sm:$0xff]
        %v209 = vld [vmem:[%s182 + $0x10] sm:$0xff]
        %v210 = vld [vmem:[%s182 + $0x18] sm:$0xff]
        %v211 = vld [vmem:[%s182 + $0x20] sm:$0xff]
        %v212 = vld [vmem:[%s182 + $0x28] sm:$0xff]
        %v213 = vld [vmem:[%s182 + $0x30] sm:$0xff]
        %v214 = vld [vmem:[%s182 + $0x38] sm:$0xff]
        %v215 = vld [vmem:[%s182 + $0x40] sm:$0xff]
        %v216 = vld [vmem:[%s182 + $0x48] sm:$0xff]
        %v217 = vld [vmem:[%s182 + $0x50] sm:$0xff]
        %v218 = vld [vmem:[%s182 + $0x58] sm:$0xff]
        %v219 = vld [vmem:[%s182 + $0x60] sm:$0xff]
        %v220 = vld [vmem:[%s196] sm:$0xff]
        %v221 = vld [vmem:[%s196 + $0x8] sm:$0xff]
        %v222 = vld [vmem:[%s196 + $0x10] sm:$0xff]
        %v223 = vld [vmem:[%s196 + $0x18] sm:$0xff]
        %v224 = vld [vmem:[%s196 + $0x20] sm:$0xff]
        %v225 = vld [vmem:[%s196 + $0x28] sm:$0xff]
        %v226 = vld [vmem:[%s196 + $0x30] sm:$0xff]
        %v227 = vld [vmem:[%s196 + $0x38] sm:$0xff]
        %v228 = vld [vmem:[%s196 + $0x40] sm:$0xff]
        %v229 = vld [vmem:[%s196 + $0x48] sm:$0xff]
        %v230 = vld [vmem:[%s196 + $0x50] sm:$0xff]
        %v231 = vld [vmem:[%s196 + $0x58] sm:$0xff]
        %v232 = vld [vmem:[%s196 + $0x60] sm:$0xff]
        %234 = vset.pattern.permute.xlu0 0
        %235 = vperm.xlu0 %234, %v207
        %v236 = vpop.permute.xlu0 %235
        %239 = vset.pattern.permute.xlu0 0
        %240 = vperm.xlu0 %239, %v208
        %v241 = vpop.permute.xlu0 %240
        %244 = vset.pattern.permute.xlu0 0
        %245 = vperm.xlu0 %244, %v209
        %v246 = vpop.permute.xlu0 %245
        %249 = vset.pattern.permute.xlu0 0
        %250 = vperm.xlu0 %249, %v210
        %v251 = vpop.permute.xlu0 %250
        %254 = vset.pattern.permute.xlu0 0
        %255 = vperm.xlu0 %254, %v211
        %v256 = vpop.permute.xlu0 %255
        %259 = vset.pattern.permute.xlu0 0
        %260 = vperm.xlu0 %259, %v212
        %v261 = vpop.permute.xlu0 %260
        %264 = vset.pattern.permute.xlu0 0
        %265 = vperm.xlu0 %264, %v213
        %v266 = vpop.permute.xlu0 %265
        %269 = vset.pattern.permute.xlu0 0
        %270 = vperm.xlu0 %269, %v214
        %v271 = vpop.permute.xlu0 %270
        %274 = vset.pattern.permute.xlu0 0
        %275 = vperm.xlu0 %274, %v215
        %v276 = vpop.permute.xlu0 %275
        %279 = vset.pattern.permute.xlu0 0
        %280 = vperm.xlu0 %279, %v216
        %v281 = vpop.permute.xlu0 %280
        %284 = vset.pattern.permute.xlu0 0
        %285 = vperm.xlu0 %284, %v217
        %v286 = vpop.permute.xlu0 %285
        %289 = vset.pattern.permute.xlu0 0
        %290 = vperm.xlu0 %289, %v218
        %v291 = vpop.permute.xlu0 %290
        %294 = vset.pattern.permute.xlu0 0
        %295 = vperm.xlu0 %294, %v219
        %v296 = vpop.permute.xlu0 %295
        %v298 = vmul.f32 %v236, %v220
        %v299 = vmul.f32 %v241, %v221
        %v300 = vmul.f32 %v246, %v222
        %v301 = vmul.f32 %v251, %v223
        %v302 = vmul.f32 %v256, %v224
        %v303 = vmul.f32 %v261, %v225
        %v304 = vmul.f32 %v266, %v226
        %v305 = vmul.f32 %v271, %v227
        %v306 = vmul.f32 %v276, %v228
        %v307 = vmul.f32 %v281, %v229
        %v308 = vmul.f32 %v286, %v230
        %v309 = vmul.f32 %v291, %v231
        %v310 = vmul.f32 %v296, %v232
        %vm311 = vcmask 785408
        %312 = vst.msk [vmem:[%s173] sm:$0xff] %vm311, %v298
        %313 = vst.msk [vmem:[%s173 + $0x8] sm:$0xff] %vm311, %v299
        %314 = vst.msk [vmem:[%s173 + $0x10] sm:$0xff] %vm311, %v300
        %315 = vst.msk [vmem:[%s173 + $0x18] sm:$0xff] %vm311, %v301
        %316 = vst.msk [vmem:[%s173 + $0x20] sm:$0xff] %vm311, %v302
        %317 = vst.msk [vmem:[%s173 + $0x28] sm:$0xff] %vm311, %v303
        %318 = vst.msk [vmem:[%s173 + $0x30] sm:$0xff] %vm311, %v304
        %319 = vst.msk [vmem:[%s173 + $0x38] sm:$0xff] %vm311, %v305
        %320 = vst.msk [vmem:[%s173 + $0x40] sm:$0xff] %vm311, %v306
        %321 = vst.msk [vmem:[%s173 + $0x48] sm:$0xff] %vm311, %v307
        %322 = vst.msk [vmem:[%s173 + $0x50] sm:$0xff] %vm311, %v308
        %323 = vst.msk [vmem:[%s173 + $0x58] sm:$0xff] %vm311, %v309
        %324 = vst.msk [vmem:[%s173 + $0x60] sm:$0xff] %vm311, %v310
        %s325 = sand.u32 %s73, 1
        %s326 = sand.u32 %s73, 1
        %s327 = smul.addr %s326, 104
        %s328 = scalar_lea.vmem [#allocation2], %s327
        // Predicated region
        $region29: #{tpu_custom_call.1} parent=27 // pred_check
          %p329 = pneg %p83
        $region30: #{tpu_custom_call.1} parent=27 // pred_check_branch
          %331 = sbr.rel (%p329) target = $region32
        $region31: #{tpu_custom_call.1} parent=27 // pred_region
          %s332 = smul.u32 13, %s13
          %s333 = ssub.s32 25, %s332
          %p334 = scmp.lt.s32.totalorder %s333, 13
          %s335 = scalar_select %p334, %s333, 13
          %s336 = smul.u32 128, %s335
          %p337 = scmp.ne.s32.totalorder 0, %s336
          %s338 = smul.addr %s332, 8
          %s339 = scalar_lea.vmem %s2, %s338
          // Predicated region
          $region33: #{tpu_custom_call.1} parent=31 // pred_check
            %p340 = pneg %p337
          $region34: #{tpu_custom_call.1} parent=31 // pred_check_branch
            %342 = sbr.rel (%p340) target = $region36
          $region35: #{tpu_custom_call.1} parent=31 // pred_region
            // Predicated region
            $region37: #{tpu_custom_call.1} parent=35 // pred_check
              _
            $region38: #{tpu_custom_call.1} parent=35 // pred_check_branch
              %344 = sbr.rel (0) target = $region40
            $region39: #{tpu_custom_call.1} parent=35 // pred_region
              // Predicated region
              $region59: #{tpu_custom_call.1} parent=39 // pred_check
                _
              $region60: #{tpu_custom_call.1} parent=39 // pred_check_branch
                %418 = sbr.rel (0) target = $region62
              $region61: #{tpu_custom_call.1} parent=39 // pred_region
                %s419 = sdiv.u32.pop %s335, 13
                %s420 = srem.u32.pop %s335, 13
                // While loop
                $region63: #{tpu_custom_call.1} parent=61 // loop_pre_header
                  _
                $region64: #{tpu_custom_call.1} parent=61 // loop_header
                  %s422 = sphi 0, %s424
                  %p423 = scmp.ge.s32.totalorder %s422, %s419
                  %s427 = sphi 0, %s458
                  %s428 = sphi %s328, %s461
                  %s429 = sphi %s339, %s462
                $region65: #{tpu_custom_call.1} parent=61 // loop_header_branch
                  %426 = sbr.rel (%p423) target = $region69
                $region66: #{tpu_custom_call.1} parent=61 // loop_body
                  %v430 = vld [vmem:[%s428] sm:$0xff]
                  %431 = vst [vmem:[%s429] sm:$0xff] %v430
                  %v432 = vld [vmem:[%s428 + $0x8] sm:$0xff]
                  %433 = vst [vmem:[%s429 + $0x8] sm:$0xff] %v432
                  %v434 = vld [vmem:[%s428 + $0x10] sm:$0xff]
                  %435 = vst [vmem:[%s429 + $0x10] sm:$0xff] %v434
                  %v436 = vld [vmem:[%s428 + $0x18] sm:$0xff]
                  %437 = vst [vmem:[%s429 + $0x18] sm:$0xff] %v436
                  %v438 = vld [vmem:[%s428 + $0x20] sm:$0xff]
                  %439 = vst [vmem:[%s429 + $0x20] sm:$0xff] %v438
                  %v440 = vld [vmem:[%s428 + $0x28] sm:$0xff]
                  %441 = vst [vmem:[%s429 + $0x28] sm:$0xff] %v440
                  %v442 = vld [vmem:[%s428 + $0x30] sm:$0xff]
                  %443 = vst [vmem:[%s429 + $0x30] sm:$0xff] %v442
                  %v444 = vld [vmem:[%s428 + $0x38] sm:$0xff]
                  %445 = vst [vmem:[%s429 + $0x38] sm:$0xff] %v444
                  %v446 = vld [vmem:[%s428 + $0x40] sm:$0xff]
                  %447 = vst [vmem:[%s429 + $0x40] sm:$0xff] %v446
                  %v448 = vld [vmem:[%s428 + $0x48] sm:$0xff]
                  %449 = vst [vmem:[%s429 + $0x48] sm:$0xff] %v448
                  %v450 = vld [vmem:[%s428 + $0x50] sm:$0xff]
                  %451 = vst [vmem:[%s429 + $0x50] sm:$0xff] %v450
                  %v452 = vld [vmem:[%s428 + $0x58] sm:$0xff]
                  %453 = vst [vmem:[%s429 + $0x58] sm:$0xff] %v452
                  %v454 = vld [vmem:[%s428 + $0x60] sm:$0xff]
                  %455 = vst [vmem:[%s429 + $0x60] sm:$0xff] %v454
                  %s456 = sadd.s32 1, %s427
                  %p457 = scmp.ge.s32.totalorder %s456, %s419
                  %s458 = scalar_select %p457, 0, %s456
                  %s459 = smul.u32 %s458, 104
                  %s460 = smul.u32 %s458, 104
                  %s461 = scalar_lea.vmem %s328, %s459 [#allocation2]
                  %s462 = scalar_lea.vmem %s339, %s460
                $region67: #{tpu_custom_call.1} parent=61 // loop_footer
                  %s424 = sadd.s32 %s422, 1
                $region68: #{tpu_custom_call.1} parent=61 // loop_footer_branch
                  %421 = sbr.rel target = $region64
                $region69: #{tpu_custom_call.1} parent=61 // loop_exit
                  _
                %s463 = sdiv.u32.pop %s335, 13
                %s464 = srem.u32.pop %s335, 13
                %s465 = smul.u32 %s463, 13
                %s466 = smul.u32 8, %s465
                %s467 = scalar_lea.vmem %s328, %s466 [#allocation2]
                %s468 = smul.u32 8, %s465
                %s469 = scalar_lea.vmem %s339, %s468
                // While loop
                $region70: #{tpu_custom_call.1} parent=61 // loop_pre_header
                  _
                $region71: #{tpu_custom_call.1} parent=61 // loop_header
                  %s471 = sphi 0, %s473
                  %p472 = scmp.ge.s32.totalorder %s471, %s464
                  %s476 = sphi 0, %s483
                  %s477 = sphi %s467, %s486
                  %s478 = sphi %s469, %s487
                $region72: #{tpu_custom_call.1} parent=61 // loop_header_branch
                  %475 = sbr.rel (%p472) target = $region76
                $region73: #{tpu_custom_call.1} parent=61 // loop_body
                  %v479 = vld [vmem:[%s477] sm:$0xff]
                  %480 = vst [vmem:[%s478] sm:$0xff] %v479
                  %s481 = sadd.s32 1, %s476
                  %p482 = scmp.ge.s32.totalorder %s481, %s464
                  %s483 = scalar_select %p482, 0, %s481
                  %s484 = smul.u32 %s483, 8
                  %s485 = smul.u32 %s483, 8
                  %s486 = scalar_lea.vmem %s467, %s484 [#allocation2]
                  %s487 = scalar_lea.vmem %s469, %s485
                $region74: #{tpu_custom_call.1} parent=61 // loop_footer
                  %s473 = sadd.s32 %s471, 1
                $region75: #{tpu_custom_call.1} parent=61 // loop_footer_branch
                  %470 = sbr.rel target = $region71
                $region76: #{tpu_custom_call.1} parent=61 // loop_exit
                  _
              $region62: #{tpu_custom_call.1} parent=39 // pred_fallthru
                _
              // Predicated region
              $region77: #{tpu_custom_call.1} parent=39 // pred_check
                _
              $region78: #{tpu_custom_call.1} parent=39 // pred_check_branch
                %489 = sbr.rel target = $region80
              $region79: #{tpu_custom_call.1} parent=39 // pred_region
                _
              $region80: #{tpu_custom_call.1} parent=39 // pred_fallthru
                _
            $region40: #{tpu_custom_call.1} parent=35 // pred_fallthru
              _
            // Predicated region
            $region41: #{tpu_custom_call.1} parent=35 // pred_check
              _
            $region42: #{tpu_custom_call.1} parent=35 // pred_check_branch
              %346 = sbr.rel target = $region44
            $region43: #{tpu_custom_call.1} parent=35 // pred_region
              %s348 = sdiv.u32.pop %s335, 13
              %s349 = srem.u32.pop %s335, 13
              // While loop
              $region45: #{tpu_custom_call.1} parent=43 // loop_pre_header
                _
              $region46: #{tpu_custom_call.1} parent=43 // loop_header
                %s351 = sphi 0, %s353
                %p352 = scmp.ge.s32.totalorder %s351, %s348
                %s356 = sphi 0, %s387
                %s357 = sphi %s328, %s390
                %s358 = sphi %s339, %s391
              $region47: #{tpu_custom_call.1} parent=43 // loop_header_branch
                %355 = sbr.rel (%p352) target = $region51
              $region48: #{tpu_custom_call.1} parent=43 // loop_body
                %v359 = vld [vmem:[%s357] sm:$0xff]
                %360 = vst [vmem:[%s358] sm:$0xff] %v359
                %v361 = vld [vmem:[%s357 + $0x8] sm:$0xff]
                %362 = vst [vmem:[%s358 + $0x8] sm:$0xff] %v361
                %v363 = vld [vmem:[%s357 + $0x10] sm:$0xff]
                %364 = vst [vmem:[%s358 + $0x10] sm:$0xff] %v363
                %v365 = vld [vmem:[%s357 + $0x18] sm:$0xff]
                %366 = vst [vmem:[%s358 + $0x18] sm:$0xff] %v365
                %v367 = vld [vmem:[%s357 + $0x20] sm:$0xff]
                %368 = vst [vmem:[%s358 + $0x20] sm:$0xff] %v367
                %v369 = vld [vmem:[%s357 + $0x28] sm:$0xff]
                %370 = vst [vmem:[%s358 + $0x28] sm:$0xff] %v369
                %v371 = vld [vmem:[%s357 + $0x30] sm:$0xff]
                %372 = vst [vmem:[%s358 + $0x30] sm:$0xff] %v371
                %v373 = vld [vmem:[%s357 + $0x38] sm:$0xff]
                %374 = vst [vmem:[%s358 + $0x38] sm:$0xff] %v373
                %v375 = vld [vmem:[%s357 + $0x40] sm:$0xff]
                %376 = vst [vmem:[%s358 + $0x40] sm:$0xff] %v375
                %v377 = vld [vmem:[%s357 + $0x48] sm:$0xff]
                %378 = vst [vmem:[%s358 + $0x48] sm:$0xff] %v377
                %v379 = vld [vmem:[%s357 + $0x50] sm:$0xff]
                %380 = vst [vmem:[%s358 + $0x50] sm:$0xff] %v379
                %v381 = vld [vmem:[%s357 + $0x58] sm:$0xff]
                %382 = vst [vmem:[%s358 + $0x58] sm:$0xff] %v381
                %v383 = vld [vmem:[%s357 + $0x60] sm:$0xff]
                %384 = vst [vmem:[%s358 + $0x60] sm:$0xff] %v383
                %s385 = sadd.s32 1, %s356
                %p386 = scmp.ge.s32.totalorder %s385, %s348
                %s387 = scalar_select %p386, 0, %s385
                %s388 = smul.u32 %s387, 104
                %s389 = smul.u32 %s387, 104
                %s390 = scalar_lea.vmem %s328, %s388 [#allocation2]
                %s391 = scalar_lea.vmem %s339, %s389
              $region49: #{tpu_custom_call.1} parent=43 // loop_footer
                %s353 = sadd.s32 %s351, 1
              $region50: #{tpu_custom_call.1} parent=43 // loop_footer_branch
                %350 = sbr.rel target = $region46
              $region51: #{tpu_custom_call.1} parent=43 // loop_exit
                _
              %s392 = sdiv.u32.pop %s335, 13
              %s393 = srem.u32.pop %s335, 13
              %s394 = smul.u32 %s392, 13
              %s395 = smul.u32 8, %s394
              %s396 = scalar_lea.vmem %s328, %s395 [#allocation2]
              %s397 = smul.u32 8, %s394
              %s398 = scalar_lea.vmem %s339, %s397
              // While loop
              $region52: #{tpu_custom_call.1} parent=43 // loop_pre_header
                _
              $region53: #{tpu_custom_call.1} parent=43 // loop_header
                %s400 = sphi 0, %s402
                %p401 = scmp.ge.s32.totalorder %s400, %s393
                %s405 = sphi 0, %s412
                %s406 = sphi %s396, %s415
                %s407 = sphi %s398, %s416
              $region54: #{tpu_custom_call.1} parent=43 // loop_header_branch
                %404 = sbr.rel (%p401) target = $region58
              $region55: #{tpu_custom_call.1} parent=43 // loop_body
                %v408 = vld [vmem:[%s406] sm:$0xff]
                %409 = vst [vmem:[%s407] sm:$0xff] %v408
                %s410 = sadd.s32 1, %s405
                %p411 = scmp.ge.s32.totalorder %s410, %s393
                %s412 = scalar_select %p411, 0, %s410
                %s413 = smul.u32 %s412, 8
                %s414 = smul.u32 %s412, 8
                %s415 = scalar_lea.vmem %s396, %s413 [#allocation2]
                %s416 = scalar_lea.vmem %s398, %s414
              $region56: #{tpu_custom_call.1} parent=43 // loop_footer
                %s402 = sadd.s32 %s400, 1
              $region57: #{tpu_custom_call.1} parent=43 // loop_footer_branch
                %399 = sbr.rel target = $region53
              $region58: #{tpu_custom_call.1} parent=43 // loop_exit
                _
            $region44: #{tpu_custom_call.1} parent=35 // pred_fallthru
              _
          $region36: #{tpu_custom_call.1} parent=31 // pred_fallthru
            _
          %490 = vnop
        $region32: #{tpu_custom_call.1} parent=27 // pred_fallthru
          _
      $region28: #{tpu_custom_call.1} parent=5 // pred_fallthru
        _
      %p491 = scmp.le.s32.totalorder 2, %s8
      // Predicated region
      $region81: #{tpu_custom_call.1} parent=5 // pred_check
        %p492 = pneg %p491
      $region82: #{tpu_custom_call.1} parent=5 // pred_check_branch
        %494 = sbr.rel (%p492) target = $region84
      $region83: #{tpu_custom_call.1} parent=5 // pred_region
        %s495 = ssub.s32 %s8, 2
        // Predicated region
        $region85: #{tpu_custom_call.1} parent=83 // pred_check
          %p496 = pneg %p89
        $region86: #{tpu_custom_call.1} parent=83 // pred_check_branch
          %498 = sbr.rel (%p496) target = $region88
        $region87: #{tpu_custom_call.1} parent=83 // pred_region
          %s499 = sand.u32 %s74, 1
          %s500 = sand.u32 %s74, 1
          %s501 = smul.addr %s500, 104
          %s502 = scalar_lea.vmem [#allocation2], %s501
        $region88: #{tpu_custom_call.1} parent=83 // pred_fallthru
          _
      $region84: #{tpu_custom_call.1} parent=5 // pred_fallthru
        _
    $region6: #{tpu_custom_call.1} parent=1 // loop_footer
      %s12 = sadd.s32 1, %s8
    $region7: #{tpu_custom_call.1} parent=1 // loop_footer_branch
      %7 = sbr.rel target = $region3
    $region8: #{tpu_custom_call.1} parent=1 // loop_exit
      _

</llo_original>
